<compile_context>
chip_gen: v6e
topology: v6e:2x2x1
jax: 0.10.0
libtpu: 0.0.40
codegen_flags: <defaults>
</compile_context>

<pallas_src>
import functools

import jax
import jax.numpy as jnp
from jax.experimental import pallas as pl
from jax.experimental.pallas import tpu as pltpu


def _sublane_multiple(dtype):
    itemsize = jnp.dtype(dtype).itemsize
    return {4: 8, 2: 16, 1: 32}.get(itemsize, 8)


def _pick_block_rows(batch, classes, dtype, target_f32_tile_bytes=6 << 20):
    """Largest sublane-aligned row tile whose f32 working set is ~target bytes.

    Budgeting by the f32 tile (not the native-dtype DMA tile) keeps the few
    full-tile f32 intermediates the body creates inside v7x's 64 MiB VMEM even
    for bf16 inputs, while amortizing the ~0.35 us per-grid-step cost.
    """
    sub = _sublane_multiple(dtype)
    rows = (target_f32_tile_bytes // max(1, classes * 4)) // sub * sub
    rows = max(sub, rows)
    batch_pad = pl.cdiv(batch, sub) * sub
    return min(rows, batch_pad)


def _default_num_parallel():
    # 2 TensorCores per chip only on v7x; on v5e/v6e the parallel grid axis is
    # just an outer serial loop, so default to 1 there.
    try:
        kind = jax.devices()[0].device_kind.lower()
    except Exception:
        return 1
    return 2 if "v7" in kind else 1


def _label_smoothing_kernel(pred_ref, tgt_ref, out_ref, acc_ref, *,
                            confidence, off_value, total_rows,
                            block_rows, tiles_per_parallel):
    p = pl.program_id(0)          # parallel slice (megacore on v7x)
    r = pl.program_id(1)          # reduction over batch tiles

    @pl.when(r == 0)
    def _():
        acc_ref[...] = jnp.zeros_like(acc_ref)

    x = pred_ref[...].astype(jnp.float32)                    # (tb, C)
    tb, c = x.shape

    # Numerically stable log-sum-exp over the class axis (lanes).
    m = jnp.max(x, axis=-1, keepdims=True)
    lse = jnp.log(jnp.sum(jnp.exp(x - m), axis=-1, keepdims=True)) + m

    # Fused target-gather + row sum:
    #   sum(true_dist * x) = sum(where(col == target, conf, off) * x)
    # (1, C) iota broadcast against the (tb, 1) targets; single lane reduce.
    col_ids = jax.lax.broadcasted_iota(jnp.int32, (1, c), 1)
    w = jnp.where(col_ids == tgt_ref[...], confidence, off_value)  # (tb, C)
    wx = jnp.sum(w * x, axis=-1, keepdims=True)                    # (tb, 1)

    row_loss = lse - wx          # == -sum(true_dist * log_softmax(x), -1)

    # Select-mask rows beyond the real batch (partial edge block / clamped
    # extra grid steps).  Keep this a select, NOT a multiply, so NaN/inf
    # garbage in out-of-bounds rows cannot leak into the sum.
    tile_idx = p * tiles_per_parallel + r
    row_ids = tile_idx * block_rows + jax.lax.broadcasted_iota(
        jnp.int32, (tb, 1), 0)
    row_loss = jnp.where(row_ids < total_rows, row_loss, 0.0)

    # Tiny (1, 1) accumulator: one cross-sublane reduce per tile.
    acc_ref[...] += jnp.sum(row_loss, axis=0, keepdims=True)

    @pl.when(r == pl.num_programs(1) - 1)
    def _():
        # Output block index is constant in r, so it stays resident across the
        # reduction axis; write only on the last step.
        ri = jax.lax.broadcasted_iota(jnp.int32, out_ref.shape, 0)
        ci = jax.lax.broadcasted_iota(jnp.int32, out_ref.shape, 1)
        out_ref[...] = jnp.where((ri == 0) & (ci == 0), acc_ref[...], 0.0)


def label_smoothing_loss(pred, target, *, classes, smoothing=0.1,
                         block_rows=None, num_parallel=None):
    """Pallas equivalent of LabelSmoothingLoss(classes, smoothing)(pred, target)."""
    B, C = pred.shape
    assert C == classes

    confidence = 1.0 - smoothing
    off_value = smoothing / (classes - 1)

    if block_rows is None:
        block_rows = _pick_block_rows(B, C, pred.dtype)
    if num_parallel is None:
        num_parallel = _default_num_parallel()

    # Grid sized from the UN-padded batch (no jnp.pad copy of pred through
    # HBM).  Any grid step whose tile starts past the last real tile is
    # clamped to the last tile by the index_map and fully masked in-kernel.
    n_tiles = pl.cdiv(B, block_rows)
    num_parallel = max(1, min(num_parallel, n_tiles))
    tiles_per_parallel = pl.cdiv(n_tiles, num_parallel)
    last_tile = n_tiles - 1

    tgt = target.astype(jnp.int32).reshape(B, 1)

    kernel = functools.partial(
        _label_smoothing_kernel,
        confidence=confidence,
        off_value=off_value,
        total_rows=B,
        block_rows=block_rows,
        tiles_per_parallel=tiles_per_parallel,
    )

    def row_map(p, r):
        return (jnp.minimum(p * tiles_per_parallel + r, last_tile), 0)

    out = pl.pallas_call(
        kernel,
        out_shape=jax.ShapeDtypeStruct((num_parallel * 8, 128), jnp.float32),
        grid_spec=pltpu.PrefetchScalarGridSpec(
            num_scalar_prefetch=0,
            grid=(num_parallel, tiles_per_parallel),
            in_specs=[
                pl.BlockSpec((block_rows, C), row_map),   # pred (native dtype)
                pl.BlockSpec((block_rows, 1), row_map),   # target indices
            ],
            # One lane-dense (8, 128) partial-sum block per parallel slice.
            out_specs=pl.BlockSpec((8, 128), lambda p, r: (p, 0)),
            scratch_shapes=[pltpu.VMEM((1, 1), jnp.float32)],
        ),
        compiler_params=pltpu.CompilerParams(
            dimension_semantics=("parallel", "arbitrary"),
            vmem_limit_bytes=48 << 20,
        ),
    )(pred, tgt)

    # Each parallel slice wrote its partial sum at [p*8, 0]; all else is 0.
    return jnp.sum(out) / jnp.float32(B)


def _reference_loss(pred, target, classes, smoothing=0.1):
    """Pure-JAX reference matching the PyTorch module."""
    logp = jax.nn.log_softmax(pred.astype(jnp.float32), axis=-1)
    off = smoothing / (classes - 1)
    true_dist = jnp.full_like(logp, off)
    true_dist = true_dist.at[jnp.arange(pred.shape[0]), target].set(1.0 - smoothing)
    return jnp.mean(jnp.sum(-true_dist * logp, axis=-1))


if __name__ == "__main__":
    key = jax.random.PRNGKey(0)
    k_pred, k_tgt = jax.random.split(key)

    B, C = 8, 32          # small demo shapes: batch=8, classes=32
    smoothing = 0.1

    pred = jax.random.normal(k_pred, (B, C), dtype=jnp.float32)
    target = jax.random.randint(k_tgt, (B,), 0, C, dtype=jnp.int32)

    loss = label_smoothing_loss(pred, target, classes=C, smoothing=smoothing)
    loss = jax.block_until_ready(loss)

    ref = _reference_loss(pred, target, C, smoothing)
    assert jnp.allclose(loss, ref, atol=1e-5, rtol=1e-5), (loss, ref)

    print("KERNEL_OK")
</pallas_src>

<mosaic_0001>
module attributes {stable_mosaic.version = 11 : i64} {
  func.func @_label_smoothing_kernel(%arg0: i32, %arg1: i32, %arg2: memref<8x32xf32, #tpu.memory_space<vmem>>, %arg3: memref<8x1xi32, #tpu.memory_space<vmem>>, %arg4: memref<8x128xf32, #tpu.memory_space<vmem>>, %arg5: memref<1x1xf32, #tpu.memory_space<vmem>>) attributes {dimension_semantics = [#tpu.dimension_semantics<parallel>, #tpu.dimension_semantics<arbitrary>], iteration_bounds = array<i64: 1, 1>, scalar_prefetch = 0 : i64, scratch_operands = 1 : i64, tpu.core_type = #tpu.core_type<tc>, window_params = [{transform_indices = @transform_0, window_bounds = array<i64: 8, 32>}, {transform_indices = @transform_1, window_bounds = array<i64: 8, 1>}, {transform_indices = @transform_2, window_bounds = array<i64: 8, 128>}]} {
    %c0_i32 = arith.constant 0 : i32
    %0 = arith.cmpi eq, %arg1, %c0_i32 : i32
    %1 = arith.extui %0 : i1 to i32
    %c0_i32_0 = arith.constant 0 : i32
    %2 = arith.cmpi ne, %1, %c0_i32_0 : i32
    scf.if %2 {
      %cst_17 = arith.constant 0.000000e+00 : f32
      %43 = vector.broadcast %cst_17 : f32 to vector<1x1xf32>
      %c0_18 = arith.constant 0 : index
      %c0_19 = arith.constant 0 : index
      %44 = vector.load %arg5[%c0_18, %c0_19] : memref<1x1xf32, #tpu.memory_space<vmem>>, vector<1x1xf32>
      tpu.vector_store %arg5[%c0_18, %c0_19], %43 {strides = array<i32>} : memref<1x1xf32, #tpu.memory_space<vmem>>, vector<1x1xf32>,
    } else {
    }
    %c0 = arith.constant 0 : index
    %c0_1 = arith.constant 0 : index
    %3 = vector.load %arg2[%c0, %c0_1] : memref<8x32xf32, #tpu.memory_space<vmem>>, vector<8x32xf32>
    %cst = arith.constant dense<0xFF800000> : vector<8xf32>
    %4 = vector.multi_reduction <maximumf>, %3, %cst [1] : vector<8x32xf32> to vector<8xf32>
    %5 = vector.shape_cast %4 : vector<8xf32> to vector<8x1xf32>
    %6 = vector.broadcast %5 : vector<8x1xf32> to vector<8x32xf32>
    %7 = arith.subf %3, %6 : vector<8x32xf32>
    %8 = math.exp %7 : vector<8x32xf32>
    %cst_2 = arith.constant dense<0.000000e+00> : vector<8xf32>
    %9 = vector.multi_reduction <add>, %8, %cst_2 [1] : vector<8x32xf32> to vector<8xf32>
    %10 = vector.shape_cast %9 : vector<8xf32> to vector<8x1xf32>
    %11 = math.log %10 : vector<8x1xf32>
    %12 = arith.addf %11, %5 : vector<8x1xf32>
    %13 = tpu.iota {dimensions = array<i32: 1>} : vector<1x32xi32>
    %c0_3 = arith.constant 0 : index
    %c0_4 = arith.constant 0 : index
    %14 = vector.load %arg3[%c0_3, %c0_4] : memref<8x1xi32, #tpu.memory_space<vmem>>, vector<8x1xi32>
    %15 = vector.broadcast %13 : vector<1x32xi32> to vector<8x32xi32>
    %16 = vector.broadcast %14 : vector<8x1xi32> to vector<8x32xi32>
    %17 = arith.cmpi eq, %15, %16 : vector<8x32xi32>
    %cst_5 = arith.constant 0.899999976 : f32
    %cst_6 = arith.constant 0.0032258064 : f32
    %18 = vector.broadcast %cst_5 : f32 to vector<8x32xf32>
    %19 = vector.broadcast %cst_6 : f32 to vector<8x32xf32>
    %20 = arith.select %17, %18, %19 : vector<8x32xi1>, vector<8x32xf32>
    %21 = arith.mulf %20, %3 : vector<8x32xf32>
    %cst_7 = arith.constant dense<0.000000e+00> : vector<8xf32>
    %22 = vector.multi_reduction <add>, %21, %cst_7 [1] : vector<8x32xf32> to vector<8xf32>
    %23 = vector.shape_cast %22 : vector<8xf32> to vector<8x1xf32>
    %24 = arith.subf %12, %23 : vector<8x1xf32>
    %c1_i32 = arith.constant 1 : i32
    %25 = arith.muli %arg0, %c1_i32 : i32
    %26 = arith.addi %25, %arg1 : i32
    %c8_i32 = arith.constant 8 : i32
    %27 = arith.muli %26, %c8_i32 : i32
    %28 = tpu.iota {dimensions = array<i32: 0>} : vector<8x1xi32>
    %29 = vector.broadcast %27 : i32 to vector<8x1xi32>
    %30 = arith.addi %29, %28 : vector<8x1xi32>
    %c8_i32_8 = arith.constant 8 : i32
    %31 = vector.broadcast %c8_i32_8 : i32 to vector<8x1xi32>
    %32 = arith.cmpi slt, %30, %31 : vector<8x1xi32>
    %cst_9 = arith.constant 0.000000e+00 : f32
    %33 = vector.broadcast %cst_9 : f32 to vector<8x1xf32>
    %34 = arith.select %32, %24, %33 : vector<8x1xi1>, vector<8x1xf32>
    %c0_10 = arith.constant 0 : index
    %c0_11 = arith.constant 0 : index
    %35 = vector.load %arg5[%c0_10, %c0_11] : memref<1x1xf32, #tpu.memory_space<vmem>>, vector<1x1xf32>
    %cst_12 = arith.constant dense<0.000000e+00> : vector<1xf32>
    %36 = vector.multi_reduction <add>, %34, %cst_12 [0] : vector<8x1xf32> to vector<1xf32>
    %37 = vector.shape_cast %36 : vector<1xf32> to vector<1x1xf32>
    %38 = arith.addf %35, %37 : vector<1x1xf32>
    %c0_13 = arith.constant 0 : index
    %c0_14 = arith.constant 0 : index
    %39 = vector.load %arg5[%c0_13, %c0_14] : memref<1x1xf32, #tpu.memory_space<vmem>>, vector<1x1xf32>
    tpu.vector_store %arg5[%c0_13, %c0_14], %38 {strides = array<i32>} : memref<1x1xf32, #tpu.memory_space<vmem>>, vector<1x1xf32>,
    %c0_i32_15 = arith.constant 0 : i32
    %40 = arith.cmpi eq, %arg1, %c0_i32_15 : i32
    %41 = arith.extui %40 : i1 to i32
    %c0_i32_16 = arith.constant 0 : i32
    %42 = arith.cmpi ne, %41, %c0_i32_16 : i32
    scf.if %42 {
      %43 = tpu.iota {dimensions = array<i32: 0>} : vector<8x128xi32>
      %44 = tpu.iota {dimensions = array<i32: 1>} : vector<8x128xi32>
      %c0_i32_17 = arith.constant 0 : i32
      %45 = vector.broadcast %c0_i32_17 : i32 to vector<8x128xi32>
      %46 = arith.cmpi eq, %43, %45 : vector<8x128xi32>
      %c0_i32_18 = arith.constant 0 : i32
      %47 = vector.broadcast %c0_i32_18 : i32 to vector<8x128xi32>
      %48 = arith.cmpi eq, %44, %47 : vector<8x128xi32>
      %49 = arith.andi %46, %48 : vector<8x128xi1>
      %c0_19 = arith.constant 0 : index
      %c0_20 = arith.constant 0 : index
      %50 = vector.load %arg5[%c0_19, %c0_20] : memref<1x1xf32, #tpu.memory_space<vmem>>, vector<1x1xf32>
      %cst_21 = arith.constant 0.000000e+00 : f32
      %51 = vector.shape_cast %50 : vector<1x1xf32> to vector<1x1xf32>
      %52 = vector.broadcast %51 : vector<1x1xf32> to vector<8x128xf32>
      %53 = vector.broadcast %cst_21 : f32 to vector<8x128xf32>
      %54 = arith.select %49, %52, %53 : vector<8x128xi1>, vector<8x128xf32>
      %c0_22 = arith.constant 0 : index
      %c0_23 = arith.constant 0 : index
      %55 = vector.load %arg4[%c0_22, %c0_23] : memref<8x128xf32, #tpu.memory_space<vmem>>, vector<8x128xf32>
      tpu.vector_store %arg4[%c0_22, %c0_23], %54 {strides = array<i32>} : memref<8x128xf32, #tpu.memory_space<vmem>>, vector<8x128xf32>,
    } else {
    }
    return
  }
  func.func @transform_0(%arg0: i32, %arg1: i32) -> (i32, i32) {
    %c1_i32 = arith.constant 1 : i32
    %0 = arith.muli %arg0, %c1_i32 : i32
    %1 = arith.addi %0, %arg1 : i32
    %c0_i32 = arith.constant 0 : i32
    %2 = arith.minsi %1, %c0_i32 : i32
    %c0_i32_0 = arith.constant 0 : i32
    %c0_i32_1 = arith.constant 0 : i32
    return %2, %c0_i32_0 : i32, i32
  }
  func.func @transform_1(%arg0: i32, %arg1: i32) -> (i32, i32) {
    %c1_i32 = arith.constant 1 : i32
    %0 = arith.muli %arg0, %c1_i32 : i32
    %1 = arith.addi %0, %arg1 : i32
    %c0_i32 = arith.constant 0 : i32
    %2 = arith.minsi %1, %c0_i32 : i32
    %c0_i32_0 = arith.constant 0 : i32
    %c0_i32_1 = arith.constant 0 : i32
    return %2, %c0_i32_0 : i32, i32
  }
  func.func @transform_2(%arg0: i32, %arg1: i32) -> (i32, i32) {
    %c0_i32 = arith.constant 0 : i32
    %c0_i32_0 = arith.constant 0 : i32
    return %arg0, %c0_i32 : i32, i32
  }
}

</mosaic_0001>

<llo_original>
// kernel: tpu_custom_call.1
$region0: #{tpu_custom_call.1}
  #allocation0 [shape = 'u32[]', space=smem, size = 0x4, offset = 0x4, fixed_abs, tag = 'smem constant byte address 0x4 - core index']
  #allocation1 [shape = 'u32[144,128]{1,0:T(1,128)}', space=vmem, size = 0x12000, scoped, tag = 'internal scratch']
  #allocation2 [shape = 'f32[1,1]{1,0:T(1,128)}', space=vmem, size = 0x200, scoped, tag = 'scratch operand']
  %s0 = inlined_call_operand.vmem [shape: f32[8,32], index: 0, kind: input, shape index: {}]
  %s1 = inlined_call_operand.vmem [shape: s32[8,1], index: 1, kind: input, shape index: {}]
  %s2 = inlined_call_operand.hbm [shape: f32[8,128], index: 2, kind: output, shape index: {}]
  %s3 = sld [smem:[#allocation0]]
  $region26: #{tpu_custom_call.1} parent=0
    _
  %s5 = ssub.s32 1, %s3
  %s6 = scalar_select 0, %s5, %s3
  $region1: #{tpu_custom_call.1} parent=0
    #allocation3 [shape = 'u8[4096]{0}', space=vmem, size = 0x1000, scoped, tag = 'output window, operand 0, single buffered']
    #allocation4 [shape = 's32[1]{0}', space=sflag, size = 0x4, scoped, tag = 'scoped memory for tpu_custom_call.1']
    %7 = vsyncpa [#allocation4], 0
    // Predicated region
    $region2: #{tpu_custom_call.1} parent=1 // pred_check
      _
    $region3: #{tpu_custom_call.1} parent=1 // pred_check_branch
      %9 = sbr.rel (0) target = $region5
    $region4: #{tpu_custom_call.1} parent=1 // pred_region
      %s10 = sadd.s32 0, 0
      %p11 = scmp.lt.s32.totalorder %s10, 0
      %s12 = scalar_select %p11, %s10, 0
      %p13 = scmp.lt.s32.totalorder %s12, 0
      %s14 = scalar_select %p13, %s12, 0
      %s15 = smul.addr %s14, 8
      %s16 = scalar_lea.vmem %s0, %s15
      %s17 = sadd.s32 0, 0
      %p18 = scmp.lt.s32.totalorder %s17, 0
      %s19 = scalar_select %p18, %s17, 0
    $region5: #{tpu_custom_call.1} parent=1 // pred_fallthru
      _
    // Predicated region
    $region6: #{tpu_custom_call.1} parent=1 // pred_check
      _
    $region7: #{tpu_custom_call.1} parent=1 // pred_check_branch
      %21 = sbr.rel (0) target = $region9
    $region8: #{tpu_custom_call.1} parent=1 // pred_region
      %s22 = sadd.s32 0, 0
      %p23 = scmp.lt.s32.totalorder %s22, 0
      %s24 = scalar_select %p23, %s22, 0
      %p25 = scmp.lt.s32.totalorder %s24, 0
      %s26 = scalar_select %p25, %s24, 0
      %s27 = smul.addr %s26, 8
      %s28 = scalar_lea.vmem %s1, %s27
      %s29 = sadd.s32 0, 0
      %p30 = scmp.lt.s32.totalorder %s29, 0
      %s31 = scalar_select %p30, %s29, 0
    $region9: #{tpu_custom_call.1} parent=1 // pred_fallthru
      _
    %s32 = sadd.s32 0, 0
    %p33 = scmp.lt.s32.totalorder %s32, 0
    %s34 = scalar_select %p33, %s32, 0
    %p35 = scmp.lt.s32.totalorder %s34, 0
    %s36 = scalar_select %p35, %s34, 0
    %s37 = smul.addr %s36, 8
    %s38 = scalar_lea.vmem %s0, %s37
    %s39 = sadd.s32 0, 0
    %p40 = scmp.lt.s32.totalorder %s39, 0
    %s41 = scalar_select %p40, %s39, 0
    %p42 = scmp.lt.s32.totalorder %s41, 0
    %s43 = scalar_select %p42, %s41, 0
    %s44 = smul.addr %s43, 8
    %s45 = scalar_lea.vmem %s1, %s44
    %s46 = sadd.s32 0, 0
    %p47 = scmp.lt.s32.totalorder %s46, 0
    %s48 = scalar_select %p47, %s46, 0
    %p49 = scmp.lt.s32.totalorder %s48, 0
    %s50 = scalar_select %p49, %s48, 0
    %s51 = smul.addr %s50, 8
    %s52 = scalar_lea.vmem %s0, %s51
    %s53 = sadd.s32 0, 0
    %p54 = scmp.lt.s32.totalorder %s53, 0
    %s55 = scalar_select %p54, %s53, 0
    %s56 = sadd.s32 0, 0
    %p57 = scmp.lt.s32.totalorder %s56, 0
    %s58 = scalar_select %p57, %s56, 0
    %p59 = scmp.lt.s32.totalorder %s58, 0
    %s60 = scalar_select %p59, %s58, 0
    %s61 = smul.addr %s60, 8
    %s62 = scalar_lea.vmem %s1, %s61
    %s63 = sadd.s32 0, 0
    %p64 = scmp.lt.s32.totalorder %s63, 0
    %s65 = scalar_select %p64, %s63, 0
    %p66 = scmp.eq.s32.totalorder 0, 0
    // Predicated region
    $region10: #{tpu_custom_call.1} parent=1 // pred_check
      %p67 = pneg %p66
    $region11: #{tpu_custom_call.1} parent=1 // pred_check_branch
      %69 = sbr.rel (%p67) target = $region13
    $region12: #{tpu_custom_call.1} parent=1 // pred_region
      %vm70 = vcmask 0
      %71 = vst.msk [vmem:[#allocation2] sm:$0x1] %vm70, 0.0
    $region13: #{tpu_custom_call.1} parent=1 // pred_fallthru
      _
    %v72 = vld [vmem:[%s52] sm:$0xff]
    %vm73 = vcmask 261120
    %v74 = vsel %vm73, %v72, -inf
    %75 = vmax.xlane.f32.xlu0 %v74
    %v76 = vpop.xlane.xlu0 %75
    %v77 = vsub.f32 %v72, %v76
    %v78 = vmul.f32 %v77, 1.442695
    %v79 = vpow.pop %v78
    %v80 = vsel %vm73, %v79, 0.0
    %81 = vadd.xlane.f32.xlu0 %v80
    %v82 = vpop.xlane.xlu0 %81
    %v83 = vlog2.pop %v82
    %v84 = vmul.f32 %v83, 0.6931472
    %v85 = vadd.f32 %v84, %v76
    %v86 = vlaneseq
    %v87 = vand.u32 %v86, 127
    %v88 = vld [vmem:[%s62] sm:$0xff]
    %89 = vset.pattern.permute.xlu0 0
    %90 = vperm.xlu0 %89, %v88
    %v91 = vpop.permute.xlu0 %90
    %vm92 = vcmp.eq.s32.totalorder %v87, %v91
    %v93 = vsel %vm92, 0.9, 0.0032258064
    %v94 = vmul.f32 %v93, %v72
    %v95 = vsel %vm73, %v94, 0.0
    %96 = vadd.xlane.f32.xlu0 %v95
    %v97 = vpop.xlane.xlu0 %96
    %v98 = vsub.f32 %v85, %v97
    %s99 = sadd.s32 0, 0
    %s100 = smul.u32 %s99, 8
    %v101 = vlaneseq
    %v102 = vshrl.u32 %v101, 7
    %v103 = vstv %s100
    %v104 = vadd.s32 %v103, %v102
    %vm105 = vcmp.lt.s32.totalorder %v104, 8
    %v106 = vsel %vm105, %v98, 0.0
    %v107 = vld [vmem:[#allocation2] sm:$0x1]
    %v108 = vrot.slane %v106, 4
    %v109 = vadd.f32 %v106, %v108
    %v110 = vrot.slane %v109, 2
    %v111 = vadd.f32 %v109, %v110
    %v112 = vrot.slane %v111, 1
    %v113 = vadd.f32 %v111, %v112
    %v114 = vadd.f32 %v107, %v113
    %vm115 = vcmask 0
    %116 = vst.msk [vmem:[#allocation2] sm:$0x1] %vm115, %v114
    // Predicated region
    $region14: #{tpu_custom_call.1} parent=1 // pred_check
      %p117 = pneg %p66
    $region15: #{tpu_custom_call.1} parent=1 // pred_check_branch
      %119 = sbr.rel (%p117) target = $region17
    $region16: #{tpu_custom_call.1} parent=1 // pred_region
      %vm120 = vcmp.eq.s32.totalorder %v102, 0
      %vm121 = vcmp.eq.s32.totalorder %v87, 0
      %vm122 = vmand %vm120, %vm121
      %v123 = vld [vmem:[#allocation2] sm:$0x1]
      %v125 = vlaneseq
      %v126 = vshrl.u32 %v125, 7
      %v127 = vsub.s32 0, %v126
      %v128 = vrot.slane %v123, %v127
      %129 = vset.pattern.permute.xlu0 0
      %130 = vperm.xlu0 %129, %v128
      %v131 = vpop.permute.xlu0 %130
      %v133 = vsel %vm122, %v131, 0.0
      %134 = vst [vmem:[#allocation3] sm:$0xff] %v133
    $region17: #{tpu_custom_call.1} parent=1 // pred_fallthru
      _
    // Predicated region
    $region18: #{tpu_custom_call.1} parent=1 // pred_check
      _
    $region19: #{tpu_custom_call.1} parent=1 // pred_check_branch
      %136 = sbr.rel (0) target = $region21
    $region20: #{tpu_custom_call.1} parent=1 // pred_region
      %s138 = ssub.s32 128, 128
      %139 = vsyncadd [#allocation4], %s138
      %s141 = sshll.u32 [#allocation3], 4
      %s142 = int_to_ptr.vmem [resolvable:$true] %s141
      %144 = dma.vmem_to_hbm [thread:$0]  %s142, 128, %s2, [#allocation4]
    $region21: #{tpu_custom_call.1} parent=1 // pred_fallthru
      _
    // Predicated region
    $region22: #{tpu_custom_call.1} parent=1 // pred_check
      _
    $region23: #{tpu_custom_call.1} parent=1 // pred_check_branch
      %146 = sbr.rel (0) target = $region25
    $region24: #{tpu_custom_call.1} parent=1 // pred_region
      %147 = dma.done [#allocation4], 128
    $region25: #{tpu_custom_call.1} parent=1 // pred_fallthru
      _
    %148 = vsyncpa [#allocation4], 1

</llo_original>
